<compile_context>
chip_gen: v5e
topology: v5e:2x2
jax: 0.10.0
libtpu: 0.0.40
codegen_flags: <defaults>
</compile_context>

<pallas_src>
import functools

import jax
import jax.numpy as jnp
from jax.experimental import pallas as pl
from jax.experimental.pallas import tpu as pltpu

_ROW_ALIGN = 32   # byte-dtype (bool/int8) sublane packing; also covers bf16/f32
_LANE = 128


def _round_up(x, m):
    return ((x + m - 1) // m) * m


def _hw_params():
    """Returns (num_core_splits, per-block streamed-byte budget, vmem-limit cap)."""
    vmem_cap = 128 << 20
    try:
        info = pltpu.get_tpu_info()
        cap = int(getattr(info, "vmem_capacity_bytes", 0) or 0)
        if cap > 0:
            vmem_cap = cap
    except Exception:
        pass
    kind = ""
    try:
        kind = str(jax.devices()[0].device_kind).lower()
    except Exception:
        pass
    small_vmem = vmem_cap <= (64 << 20)        # v7x-class TensorCore (64 MiB)
    multi_tc = small_vmem or ("v4" in kind) or ("v5p" in kind) or ("7" in kind)
    if small_vmem:
        # v7x: smaller physical VMEM -> modest tiles, conservative limit.
        return (2 if multi_tc else 1), (8 << 20), (52 << 20)
    # v5e / v6e: 128 MiB physical VMEM -> larger tiles amortize per-step cost.
    return (2 if multi_tc else 1), (16 << 20), (96 << 20)


def _masked_bce_kernel(*refs, tiles_per_split, tile_rows, batch_rows,
                       label_smoothing, has_mixup, needs_row_guard):
    if has_mixup:
        (pred_ref, true_ref, mask_ref, mix_ref,
         sum_ref, cnt_ref, acc_sum, acc_cnt) = refs
    else:
        (pred_ref, true_ref, mask_ref,
         sum_ref, cnt_ref, acc_sum, acc_cnt) = refs
        mix_ref = None

    p = pl.program_id(0)            # core-split axis ("parallel")
    j = pl.program_id(1)            # row-tile reduction axis ("arbitrary")
    nj = pl.num_programs(1)
    T = acc_sum.shape[1]

    @pl.when(j == 0)
    def _():
        acc_sum[...] = jnp.zeros_like(acc_sum)
        acc_cnt[...] = jnp.zeros_like(acc_cnt)

    row0 = (p * tiles_per_split + j) * tile_rows          # first global row of tile
    if needs_row_guard:
        iota_rows = jax.lax.broadcasted_iota(jnp.int32, (8, T), 0)

    # Strip-wise compute: 8 rows at a time straight from the Refs.  Working set
    # stays in vregs; acc_sum/acc_cnt (VMEM) are touched once per grid step.
    part_s0 = part_c0 = part_s1 = part_c1 = None
    for idx, r in enumerate(range(0, tile_rows, 8)):
        x = pred_ref[r:r + 8, :].astype(jnp.float32)      # logits   (8, T)
        z = true_ref[r:r + 8, :].astype(jnp.float32)      # targets  (8, T)
        if label_smoothing > 0.0:
            z = jnp.clip(z, label_smoothing, 1.0 - label_smoothing)

        mraw = mask_ref[r:r + 8, :]
        valid = mraw if mraw.dtype == jnp.bool_ else (mraw != 0)
        if needs_row_guard:
            valid = valid & ((iota_rows + (row0 + r)) < batch_rows)

        # Numerically stable BCE-with-logits (matches torch.nn.BCEWithLogitsLoss):
        #   max(x, 0) - x*z + log1p(exp(-|x|))
        bce = jnp.maximum(x, 0.0) - x * z + jnp.log1p(jnp.exp(-jnp.abs(x)))
        if has_mixup:
            w = mix_ref[r:r + 8, :].astype(jnp.float32)   # (8, 1), lane-broadcast
            bce = bce * w

        # where-select (not multiply) so stale data in partial tail blocks,
        # even NaN/Inf, can never leak into the sums.
        s = jnp.where(valid, bce, 0.0)
        c = valid.astype(jnp.float32)

        if idx % 2 == 0:
            part_s0 = s if part_s0 is None else part_s0 + s
            part_c0 = c if part_c0 is None else part_c0 + c
        else:
            part_s1 = s if part_s1 is None else part_s1 + s
            part_c1 = c if part_c1 is None else part_c1 + c

    if part_s1 is not None:
        part_s0 = part_s0 + part_s1
        part_c0 = part_c0 + part_c1
    acc_sum[...] += part_s0
    acc_cnt[...] += part_c0

    # The expensive lane+sublane reduce happens exactly once, on the last step.
    @pl.when(j == nj - 1)
    def _():
        ssum = jnp.sum(acc_sum[...])
        scnt = jnp.sum(acc_cnt[...])
        rr = jax.lax.broadcasted_iota(jnp.int32, (8, _LANE), 0)
        cc = jax.lax.broadcasted_iota(jnp.int32, (8, _LANE), 1)
        pick = (rr == 0) & (cc == 0)
        sum_ref[...] = jnp.where(pick, ssum, 0.0)
        cnt_ref[...] = jnp.where(pick, scnt, 0.0)


def masked_bce_with_logits_loss(y_pred, y_true, pad_mask, mixup_coeffs=None,
                                label_smoothing=0.0, tile_rows=None,
                                num_core_splits=None):
    """Pallas-TPU equivalent of MaskedBCEWithLogitsLoss.forward."""
    orig_dtype = y_pred.dtype
    B, T = y_pred.shape

    nsplit_hw, block_budget, vmem_cap_limit = _hw_params()
    if num_core_splits is None:
        num_core_splits = nsplit_hw

    mask_itemsize = jnp.dtype(pad_mask.dtype).itemsize
    bytes_per_row = T * (jnp.dtype(y_pred.dtype).itemsize
                         + jnp.dtype(y_true.dtype).itemsize
                         + mask_itemsize)

    # ---- choose a large row tile that fits the streamed-bytes budget --------
    b_aligned = _round_up(B, 8)
    budget_rows = max(_ROW_ALIGN,
                      (block_budget // max(bytes_per_row, 1)) // _ROW_ALIGN * _ROW_ALIGN)
    if tile_rows is None:
        tile_rows = budget_rows
    tile_rows = max(8, (min(tile_rows, budget_rows) // 8) * 8)
    if tile_rows >= b_aligned:
        tile_rows = b_aligned                    # one tile spans the whole batch
    elif tile_rows >= _ROW_ALIGN:
        tile_rows = (tile_rows // _ROW_ALIGN) * _ROW_ALIGN   # byte-mask friendly

    n_tiles = pl.cdiv(B, tile_rows)
    # Split across TensorCores only when it divides evenly (no fully-OOB tiles);
    # on 1-TC chips (v5e/v6e) nsplit is already 1 from _hw_params().
    nsplit = num_core_splits if (num_core_splits > 1
                                 and n_tiles % num_core_splits == 0) else 1
    tiles_per_split = n_tiles // nsplit
    needs_row_guard = (n_tiles * tile_rows != B)

    has_mixup = mixup_coeffs is not None
    tile_idx = lambda p, j: (p * tiles_per_split + j, 0)

    operands = [y_pred, y_true, pad_mask]        # mask streamed in native dtype
    in_specs = [
        pl.BlockSpec((tile_rows, T), tile_idx),
        pl.BlockSpec((tile_rows, T), tile_idx),
        pl.BlockSpec((tile_rows, T), tile_idx),
    ]
    if has_mixup:
        mix = mixup_coeffs.astype(jnp.float32).reshape(B, 1)
        operands.append(mix)
        in_specs.append(pl.BlockSpec((tile_rows, 1), tile_idx))  # per-tile stream

    out_shape = (jax.ShapeDtypeStruct((nsplit * 8, _LANE), jnp.float32),
                 jax.ShapeDtypeStruct((nsplit * 8, _LANE), jnp.float32))
    out_specs = [pl.BlockSpec((8, _LANE), lambda p, j: (p, 0)),
                 pl.BlockSpec((8, _LANE), lambda p, j: (p, 0))]

    scratch_shapes = [pltpu.VMEM((8, T), jnp.float32),   # loss partials
                      pltpu.VMEM((8, T), jnp.float32)]   # count partials

    # Double-buffered streamed inputs (+ lane-padded mixup tile) + accumulators
    # + headroom for strip temporaries, clamped to the per-generation cap.
    mix_bytes = (2 * tile_rows * _LANE * 4) if has_mixup else 0
    vmem_need = (2 * tile_rows * bytes_per_row
                 + mix_bytes
                 + 2 * 8 * T * 4
                 + 2 * 2 * 8 * _LANE * 4
                 + (2 << 20))
    vmem_limit = int(min(vmem_cap_limit, max(32 << 20, int(vmem_need * 1.25))))

    kernel = functools.partial(
        _masked_bce_kernel,
        tiles_per_split=tiles_per_split,
        tile_rows=tile_rows,
        batch_rows=B,
        label_smoothing=float(label_smoothing),
        has_mixup=has_mixup,
        needs_row_guard=needs_row_guard)

    sum_part, cnt_part = pl.pallas_call(
        kernel,
        out_shape=out_shape,
        grid_spec=pltpu.PrefetchScalarGridSpec(
            num_scalar_prefetch=0,
            grid=(nsplit, tiles_per_split),
            in_specs=in_specs,
            out_specs=out_specs,
            scratch_shapes=scratch_shapes),
        compiler_params=pltpu.CompilerParams(
            dimension_semantics=("parallel", "arbitrary"),
            vmem_limit_bytes=vmem_limit),
    )(*operands)

    s = jnp.sum(sum_part)
    c = jnp.sum(cnt_part)
    # pad_mask.sum() == 0  -> return 0.0 (same as the PyTorch early-out)
    loss = jnp.where(c > 0, s / jnp.maximum(c, 1.0), jnp.float32(0.0))
    return loss.astype(orig_dtype)


def _reference(y_pred, y_true, pad_mask, mixup_coeffs=None, label_smoothing=0.0):
    """Pure-JAX reference for sanity checking."""
    x = y_pred.astype(jnp.float32)
    z = y_true.astype(jnp.float32)
    if label_smoothing > 0.0:
        z = jnp.clip(z, label_smoothing, 1.0 - label_smoothing)
    bce = jnp.maximum(x, 0.0) - x * z + jnp.log1p(jnp.exp(-jnp.abs(x)))
    if mixup_coeffs is not None:
        bce = bce * mixup_coeffs.astype(jnp.float32)[:, None]
    m = (pad_mask != 0).astype(jnp.float32)
    c = jnp.sum(m)
    return jnp.where(c > 0, jnp.sum(bce * m) / jnp.maximum(c, 1.0), 0.0)


if __name__ == "__main__":
    key = jax.random.PRNGKey(0)
    k1, k2, k3, k4 = jax.random.split(key, 4)

    B, T = 16, 256
    y_pred = jax.random.normal(k1, (B, T), dtype=jnp.float32)
    y_true = (jax.random.uniform(k2, (B, T)) > 0.5).astype(jnp.float32)
    pad_mask = jax.random.uniform(k3, (B, T)) > 0.3          # bool, no convert
    mixup_coeffs = jax.random.uniform(k4, (B,), dtype=jnp.float32)

    # 1) no mixup, no smoothing
    out1 = masked_bce_with_logits_loss(y_pred, y_true, pad_mask)
    jax.block_until_ready(out1)
    ref1 = _reference(y_pred, y_true, pad_mask)
    assert jnp.allclose(out1, ref1, rtol=1e-5, atol=1e-6), (out1, ref1)

    # 2) mixup + label smoothing
    out2 = masked_bce_with_logits_loss(y_pred, y_true, pad_mask,
                                       mixup_coeffs=mixup_coeffs,
                                       label_smoothing=0.1)
    jax.block_until_ready(out2)
    ref2 = _reference(y_pred, y_true, pad_mask, mixup_coeffs, 0.1)
    assert jnp.allclose(out2, ref2, rtol=1e-5, atol=1e-6), (out2, ref2)

    # 3) multi-tile with a ragged tail (80 = 2*32 + 16): exercises the
    #    in-kernel row guard instead of wrapper padding.
    B2, T2 = 80, 256
    kk = jax.random.split(jax.random.PRNGKey(1), 4)
    yp2 = jax.random.normal(kk[0], (B2, T2), dtype=jnp.float32)
    yt2 = (jax.random.uniform(kk[1], (B2, T2)) > 0.5).astype(jnp.float32)
    pm2 = jax.random.uniform(kk[2], (B2, T2)) > 0.3
    mx2 = jax.random.uniform(kk[3], (B2,), dtype=jnp.float32)
    out3 = masked_bce_with_logits_loss(yp2, yt2, pm2, mixup_coeffs=mx2,
                                       label_smoothing=0.05, tile_rows=32)
    jax.block_until_ready(out3)
    ref3 = _reference(yp2, yt2, pm2, mx2, 0.05)
    assert jnp.allclose(out3, ref3, rtol=1e-5, atol=1e-6), (out3, ref3)

    # 4) float-valued mask dtype (read in-kernel as-is, no convert pass)
    pm_f32 = pm2.astype(jnp.float32)
    out4 = masked_bce_with_logits_loss(yp2, yt2, pm_f32, mixup_coeffs=mx2,
                                       label_smoothing=0.05, tile_rows=32)
    jax.block_until_ready(out4)
    assert jnp.allclose(out4, ref3, rtol=1e-5, atol=1e-6), (out4, ref3)

    # 5) empty mask -> 0.0 (PyTorch early-out)
    out5 = masked_bce_with_logits_loss(y_pred, y_true,
                                       jnp.zeros((B, T), dtype=bool))
    jax.block_until_ready(out5)
    assert jnp.allclose(out5, 0.0), out5

    print("KERNEL_OK")
</pallas_src>

<mosaic_0001>
module attributes {stable_mosaic.version = 11 : i64} {
  func.func @_masked_bce_kernel(%arg0: i32, %arg1: i32, %arg2: memref<16x256xf32, #tpu.memory_space<vmem>>, %arg3: memref<16x256xf32, #tpu.memory_space<vmem>>, %arg4: memref<16x256xi32, #tpu.memory_space<vmem>>, %arg5: memref<8x128xf32, #tpu.memory_space<vmem>>, %arg6: memref<8x128xf32, #tpu.memory_space<vmem>>, %arg7: memref<8x256xf32, #tpu.memory_space<vmem>>, %arg8: memref<8x256xf32, #tpu.memory_space<vmem>>) attributes {dimension_semantics = [#tpu.dimension_semantics<parallel>, #tpu.dimension_semantics<arbitrary>], iteration_bounds = array<i64: 1, 1>, scalar_prefetch = 0 : i64, scratch_operands = 2 : i64, tpu.core_type = #tpu.core_type<tc>, window_params = [{transform_indices = @transform_0, window_bounds = array<i64: 16, 256>}, {transform_indices = @transform_1, window_bounds = array<i64: 16, 256>}, {transform_indices = @transform_2, window_bounds = array<i64: 16, 256>}, {transform_indices = @transform_3, window_bounds = array<i64: 8, 128>}, {transform_indices = @transform_4, window_bounds = array<i64: 8, 128>}]} {
    %c0_i32 = arith.constant 0 : i32
    %0 = arith.cmpi eq, %arg1, %c0_i32 : i32
    %1 = arith.extui %0 : i1 to i32
    %c0_i32_0 = arith.constant 0 : i32
    %2 = arith.cmpi ne, %1, %c0_i32_0 : i32
    scf.if %2 {
      %cst_28 = arith.constant 0.000000e+00 : f32
      %50 = vector.broadcast %cst_28 : f32 to vector<8x256xf32>
      %c0_29 = arith.constant 0 : index
      %c0_30 = arith.constant 0 : index
      %51 = vector.load %arg7[%c0_29, %c0_30] : memref<8x256xf32, #tpu.memory_space<vmem>>, vector<8x256xf32>
      tpu.vector_store %arg7[%c0_29, %c0_30], %50 {strides = array<i32>} : memref<8x256xf32, #tpu.memory_space<vmem>>, vector<8x256xf32>,
      %cst_31 = arith.constant 0.000000e+00 : f32
      %52 = vector.broadcast %cst_31 : f32 to vector<8x256xf32>
      %c0_32 = arith.constant 0 : index
      %c0_33 = arith.constant 0 : index
      %53 = vector.load %arg8[%c0_32, %c0_33] : memref<8x256xf32, #tpu.memory_space<vmem>>, vector<8x256xf32>
      tpu.vector_store %arg8[%c0_32, %c0_33], %52 {strides = array<i32>} : memref<8x256xf32, #tpu.memory_space<vmem>>, vector<8x256xf32>,
    } else {
    }
    %c0 = arith.constant 0 : index
    %c0_1 = arith.constant 0 : index
    %3 = vector.load %arg2[%c0, %c0_1] : memref<16x256xf32, #tpu.memory_space<vmem>>, vector<8x256xf32>
    %c0_2 = arith.constant 0 : index
    %c0_3 = arith.constant 0 : index
    %4 = vector.load %arg3[%c0_2, %c0_3] : memref<16x256xf32, #tpu.memory_space<vmem>>, vector<8x256xf32>
    %c0_4 = arith.constant 0 : index
    %c0_5 = arith.constant 0 : index
    %5 = vector.load %arg4[%c0_4, %c0_5] : memref<16x256xi32, #tpu.memory_space<vmem>>, vector<8x256xi32>
    %cst = arith.constant dense<0> : vector<8x256xi32>
    %6 = arith.cmpi ne, %5, %cst : vector<8x256xi32>
    %cst_6 = arith.constant 0.000000e+00 : f32
    %7 = vector.broadcast %cst_6 : f32 to vector<8x256xf32>
    %8 = arith.maximumf %3, %7 : vector<8x256xf32>
    %9 = arith.mulf %3, %4 : vector<8x256xf32>
    %10 = arith.subf %8, %9 : vector<8x256xf32>
    %11 = math.absf %3 : vector<8x256xf32>
    %cst_7 = arith.constant 0.000000e+00 : f32
    %12 = vector.broadcast %cst_7 : f32 to vector<8x256xf32>
    %13 = arith.subf %12, %11 : vector<8x256xf32>
    %14 = math.exp %13 : vector<8x256xf32>
    %15 = math.log1p %14 : vector<8x256xf32>
    %16 = arith.addf %10, %15 : vector<8x256xf32>
    %cst_8 = arith.constant 0.000000e+00 : f32
    %17 = vector.broadcast %cst_8 : f32 to vector<8x256xf32>
    %18 = arith.select %6, %16, %17 : vector<8x256xi1>, vector<8x256xf32>
    %19 = arith.extui %6 : vector<8x256xi1> to vector<8x256xi32>
    %20 = arith.sitofp %19 : vector<8x256xi32> to vector<8x256xf32>
    %c8 = arith.constant 8 : index
    %c0_9 = arith.constant 0 : index
    %21 = vector.load %arg2[%c8, %c0_9] : memref<16x256xf32, #tpu.memory_space<vmem>>, vector<8x256xf32>
    %c8_10 = arith.constant 8 : index
    %c0_11 = arith.constant 0 : index
    %22 = vector.load %arg3[%c8_10, %c0_11] : memref<16x256xf32, #tpu.memory_space<vmem>>, vector<8x256xf32>
    %c8_12 = arith.constant 8 : index
    %c0_13 = arith.constant 0 : index
    %23 = vector.load %arg4[%c8_12, %c0_13] : memref<16x256xi32, #tpu.memory_space<vmem>>, vector<8x256xi32>
    %cst_14 = arith.constant dense<0> : vector<8x256xi32>
    %24 = arith.cmpi ne, %23, %cst_14 : vector<8x256xi32>
    %cst_15 = arith.constant 0.000000e+00 : f32
    %25 = vector.broadcast %cst_15 : f32 to vector<8x256xf32>
    %26 = arith.maximumf %21, %25 : vector<8x256xf32>
    %27 = arith.mulf %21, %22 : vector<8x256xf32>
    %28 = arith.subf %26, %27 : vector<8x256xf32>
    %29 = math.absf %21 : vector<8x256xf32>
    %cst_16 = arith.constant 0.000000e+00 : f32
    %30 = vector.broadcast %cst_16 : f32 to vector<8x256xf32>
    %31 = arith.subf %30, %29 : vector<8x256xf32>
    %32 = math.exp %31 : vector<8x256xf32>
    %33 = math.log1p %32 : vector<8x256xf32>
    %34 = arith.addf %28, %33 : vector<8x256xf32>
    %cst_17 = arith.constant 0.000000e+00 : f32
    %35 = vector.broadcast %cst_17 : f32 to vector<8x256xf32>
    %36 = arith.select %24, %34, %35 : vector<8x256xi1>, vector<8x256xf32>
    %37 = arith.extui %24 : vector<8x256xi1> to vector<8x256xi32>
    %38 = arith.sitofp %37 : vector<8x256xi32> to vector<8x256xf32>
    %39 = arith.addf %18, %36 : vector<8x256xf32>
    %40 = arith.addf %20, %38 : vector<8x256xf32>
    %c0_18 = arith.constant 0 : index
    %c0_19 = arith.constant 0 : index
    %41 = vector.load %arg7[%c0_18, %c0_19] : memref<8x256xf32, #tpu.memory_space<vmem>>, vector<8x256xf32>
    %42 = arith.addf %41, %39 : vector<8x256xf32>
    %c0_20 = arith.constant 0 : index
    %c0_21 = arith.constant 0 : index
    %43 = vector.load %arg7[%c0_20, %c0_21] : memref<8x256xf32, #tpu.memory_space<vmem>>, vector<8x256xf32>
    tpu.vector_store %arg7[%c0_20, %c0_21], %42 {strides = array<i32>} : memref<8x256xf32, #tpu.memory_space<vmem>>, vector<8x256xf32>,
    %c0_22 = arith.constant 0 : index
    %c0_23 = arith.constant 0 : index
    %44 = vector.load %arg8[%c0_22, %c0_23] : memref<8x256xf32, #tpu.memory_space<vmem>>, vector<8x256xf32>
    %45 = arith.addf %44, %40 : vector<8x256xf32>
    %c0_24 = arith.constant 0 : index
    %c0_25 = arith.constant 0 : index
    %46 = vector.load %arg8[%c0_24, %c0_25] : memref<8x256xf32, #tpu.memory_space<vmem>>, vector<8x256xf32>
    tpu.vector_store %arg8[%c0_24, %c0_25], %45 {strides = array<i32>} : memref<8x256xf32, #tpu.memory_space<vmem>>, vector<8x256xf32>,
    %c0_i32_26 = arith.constant 0 : i32
    %47 = arith.cmpi eq, %arg1, %c0_i32_26 : i32
    %48 = arith.extui %47 : i1 to i32
    %c0_i32_27 = arith.constant 0 : i32
    %49 = arith.cmpi ne, %48, %c0_i32_27 : i32
    scf.if %49 {
      %c0_28 = arith.constant 0 : index
      %c0_29 = arith.constant 0 : index
      %50 = vector.load %arg7[%c0_28, %c0_29] : memref<8x256xf32, #tpu.memory_space<vmem>>, vector<8x256xf32>
      %51 = vector.shape_cast %50 : vector<8x256xf32> to vector<1x8x256xf32>
      %cst_30 = arith.constant dense<0.000000e+00> : vector<1xf32>
      %52 = vector.multi_reduction <add>, %51, %cst_30 [1, 2] : vector<1x8x256xf32> to vector<1xf32>
      %53 = vector.shape_cast %52 : vector<1xf32> to vector<1x1x1xf32>
      %54 = vector.extract %53[0, 0, 0] : f32 from vector<1x1x1xf32>
      %c0_31 = arith.constant 0 : index
      %c0_32 = arith.constant 0 : index
      %55 = vector.load %arg8[%c0_31, %c0_32] : memref<8x256xf32, #tpu.memory_space<vmem>>, vector<8x256xf32>
      %56 = vector.shape_cast %55 : vector<8x256xf32> to vector<1x8x256xf32>
      %cst_33 = arith.constant dense<0.000000e+00> : vector<1xf32>
      %57 = vector.multi_reduction <add>, %56, %cst_33 [1, 2] : vector<1x8x256xf32> to vector<1xf32>
      %58 = vector.shape_cast %57 : vector<1xf32> to vector<1x1x1xf32>
      %59 = vector.extract %58[0, 0, 0] : f32 from vector<1x1x1xf32>
      %60 = tpu.iota {dimensions = array<i32: 0>} : vector<8x128xi32>
      %61 = tpu.iota {dimensions = array<i32: 1>} : vector<8x128xi32>
      %c0_i32_34 = arith.constant 0 : i32
      %62 = vector.broadcast %c0_i32_34 : i32 to vector<8x128xi32>
      %63 = arith.cmpi eq, %60, %62 : vector<8x128xi32>
      %c0_i32_35 = arith.constant 0 : i32
      %64 = vector.broadcast %c0_i32_35 : i32 to vector<8x128xi32>
      %65 = arith.cmpi eq, %61, %64 : vector<8x128xi32>
      %66 = arith.andi %63, %65 : vector<8x128xi1>
      %cst_36 = arith.constant 0.000000e+00 : f32
      %67 = vector.broadcast %54 : f32 to vector<8x128xf32>
      %68 = vector.broadcast %cst_36 : f32 to vector<8x128xf32>
      %69 = arith.select %66, %67, %68 : vector<8x128xi1>, vector<8x128xf32>
      %c0_37 = arith.constant 0 : index
      %c0_38 = arith.constant 0 : index
      %70 = vector.load %arg5[%c0_37, %c0_38] : memref<8x128xf32, #tpu.memory_space<vmem>>, vector<8x128xf32>
      tpu.vector_store %arg5[%c0_37, %c0_38], %69 {strides = array<i32>} : memref<8x128xf32, #tpu.memory_space<vmem>>, vector<8x128xf32>,
      %cst_39 = arith.constant 0.000000e+00 : f32
      %71 = vector.broadcast %59 : f32 to vector<8x128xf32>
      %72 = vector.broadcast %cst_39 : f32 to vector<8x128xf32>
      %73 = arith.select %66, %71, %72 : vector<8x128xi1>, vector<8x128xf32>
      %c0_40 = arith.constant 0 : index
      %c0_41 = arith.constant 0 : index
      %74 = vector.load %arg6[%c0_40, %c0_41] : memref<8x128xf32, #tpu.memory_space<vmem>>, vector<8x128xf32>
      tpu.vector_store %arg6[%c0_40, %c0_41], %73 {strides = array<i32>} : memref<8x128xf32, #tpu.memory_space<vmem>>, vector<8x128xf32>,
    } else {
    }
    return
  }
  func.func @transform_0(%arg0: i32, %arg1: i32) -> (i32, i32) {
    %c1_i32 = arith.constant 1 : i32
    %0 = arith.muli %arg0, %c1_i32 : i32
    %1 = arith.addi %0, %arg1 : i32
    %c0_i32 = arith.constant 0 : i32
    %c0_i32_0 = arith.constant 0 : i32
    return %1, %c0_i32 : i32, i32
  }
  func.func @transform_1(%arg0: i32, %arg1: i32) -> (i32, i32) {
    %c1_i32 = arith.constant 1 : i32
    %0 = arith.muli %arg0, %c1_i32 : i32
    %1 = arith.addi %0, %arg1 : i32
    %c0_i32 = arith.constant 0 : i32
    %c0_i32_0 = arith.constant 0 : i32
    return %1, %c0_i32 : i32, i32
  }
  func.func @transform_2(%arg0: i32, %arg1: i32) -> (i32, i32) {
    %c1_i32 = arith.constant 1 : i32
    %0 = arith.muli %arg0, %c1_i32 : i32
    %1 = arith.addi %0, %arg1 : i32
    %c0_i32 = arith.constant 0 : i32
    %c0_i32_0 = arith.constant 0 : i32
    return %1, %c0_i32 : i32, i32
  }
  func.func @transform_3(%arg0: i32, %arg1: i32) -> (i32, i32) {
    %c0_i32 = arith.constant 0 : i32
    %c0_i32_0 = arith.constant 0 : i32
    return %arg0, %c0_i32 : i32, i32
  }
  func.func @transform_4(%arg0: i32, %arg1: i32) -> (i32, i32) {
    %c0_i32 = arith.constant 0 : i32
    %c0_i32_0 = arith.constant 0 : i32
    return %arg0, %c0_i32 : i32, i32
  }
}

</mosaic_0001>

<llo_original>
// kernel: tpu_custom_call.1
$region0: #{tpu_custom_call.1}
  #allocation0 [shape = 'u32[]', space=smem, size = 0x4, offset = 0x4, fixed_abs, tag = 'smem constant byte address 0x4 - core index']
  #allocation1 [shape = 'u32[72,128]{1,0:T(1,128)}', space=vmem, size = 0x9000, scoped, tag = 'internal scratch']
  #allocation2 [shape = 'f32[8,256]{1,0:T(8,128)}', space=vmem, size = 0x2000, scoped, tag = 'scratch operand']
  #allocation3 [shape = 'f32[8,256]{1,0:T(8,128)}', space=vmem, size = 0x2000, scoped, tag = 'scratch operand']
  %s0 = inlined_call_operand.vmem [shape: f32[16,256], index: 0, kind: input, shape index: {}]
  %s1 = inlined_call_operand.hbm [shape: f32[16,256], index: 1, kind: input, shape index: {}]
  %s2 = inlined_call_operand.vmem [shape: s32[16,256], index: 2, kind: input, shape index: {}]
  %s3 = inlined_call_operand.hbm [shape: f32[8,128], index: 3, kind: output, shape index: {0}]
  %s4 = inlined_call_operand.hbm [shape: f32[8,128], index: 4, kind: output, shape index: {1}]
  %5 = xla_tuple %s3, %s4
  %s6 = sld [smem:[#allocation0]]
  $region42: #{tpu_custom_call.1} parent=0
    _
  %s8 = ssub.s32 1, %s6
  %s9 = scalar_select 0, %s8, %s6
  $region1: #{tpu_custom_call.1} parent=0
    #allocation4 [shape = 'u8[16384]{0}', space=vmem, size = 0x4000, scoped, tag = 'input window, operand 1, single buffered']
    #allocation5 [shape = 's32[1]{0}', space=sflag, size = 0x4, scoped, tag = 'scoped memory for tpu_custom_call.1']
    #allocation6 [shape = 's32[1]{0}', space=sflag, size = 0x4, scoped, tag = 'scoped memory for tpu_custom_call.1']
    #allocation7 [shape = 'u8[4096]{0}', space=vmem, size = 0x1000, scoped, tag = 'output window, operand 0, single buffered']
    #allocation8 [shape = 'u8[4096]{0}', space=vmem, size = 0x1000, scoped, tag = 'output window, operand 1, single buffered']
    #allocation9 [shape = 's32[1]{0}', space=sflag, size = 0x4, scoped, tag = 'scoped memory for tpu_custom_call.1']
    %10 = vsyncpa [#allocation5], 0
    %11 = vsyncpa [#allocation6], 0
    %12 = vsyncpa [#allocation9], 0
    // Predicated region
    $region2: #{tpu_custom_call.1} parent=1 // pred_check
      _
    $region3: #{tpu_custom_call.1} parent=1 // pred_check_branch
      %14 = sbr.rel (0) target = $region5
    $region4: #{tpu_custom_call.1} parent=1 // pred_region
      %s15 = sadd.s32 0, 0
      %s16 = smul.u32 2, %s15
      %p17 = scmp.lt.s32.totalorder %s16, 1
      %s18 = scalar_select %p17, %s16, 1
      %s19 = smul.addr %s18, 2
      %s20 = smul.addr %s19, 8
      %s21 = scalar_lea.vmem %s0, %s20
      %s22 = sadd.s32 0, 0
      %s23 = smul.u32 2, %s22
    $region5: #{tpu_custom_call.1} parent=1 // pred_fallthru
      _
    // Predicated region
    $region6: #{tpu_custom_call.1} parent=1 // pred_check
      _
    $region7: #{tpu_custom_call.1} parent=1 // pred_check_branch
      %25 = sbr.rel (0) target = $region9
    $region8: #{tpu_custom_call.1} parent=1 // pred_region
      %s26 = sadd.s32 0, 0
      %s27 = smul.u32 2, %s26
      %29 = vsyncadd [#allocation5], 0
      %s30 = smul.addr %s27, 2
      %s31 = smul.addr %s30, 8
      %s32 = scalar_lea.hbm %s1, %s31
      %s33 = sshll.u32 %s32, 4
      %s34 = int_to_ptr.hbm [resolvable:$true] %s33
      %s35 = sshll.u32 [#allocation4], 4
      %s36 = int_to_ptr.vmem [resolvable:$true] %s35
      %41 = dma.hbm_to_vmem [thread:$0]  %s34, 512, %s36, [#allocation5], 256, 256, 16
    $region9: #{tpu_custom_call.1} parent=1 // pred_fallthru
      _
    // Predicated region
    $region10: #{tpu_custom_call.1} parent=1 // pred_check
      _
    $region11: #{tpu_custom_call.1} parent=1 // pred_check_branch
      %43 = sbr.rel (0) target = $region13
    $region12: #{tpu_custom_call.1} parent=1 // pred_region
      %s44 = sadd.s32 0, 0
      %s45 = smul.u32 2, %s44
      %p46 = scmp.lt.s32.totalorder %s45, 1
      %s47 = scalar_select %p46, %s45, 1
      %s48 = smul.addr %s47, 2
      %s49 = smul.addr %s48, 8
      %s50 = scalar_lea.vmem %s2, %s49
      %s51 = sadd.s32 0, 0
      %s52 = smul.u32 2, %s51
    $region13: #{tpu_custom_call.1} parent=1 // pred_fallthru
      _
    // Predicated region
    $region14: #{tpu_custom_call.1} parent=1 // pred_check
      _
    $region15: #{tpu_custom_call.1} parent=1 // pred_check_branch
      %54 = sbr.rel (0) target = $region17
    $region16: #{tpu_custom_call.1} parent=1 // pred_region
      %56 = dma.done [#allocation5], 512
    $region17: #{tpu_custom_call.1} parent=1 // pred_fallthru
      _
    %s57 = sadd.s32 0, 0
    %s58 = smul.u32 2, %s57
    %p59 = scmp.lt.s32.totalorder %s58, 1
    %s60 = scalar_select %p59, %s58, 1
    %s61 = smul.addr %s60, 2
    %s62 = smul.addr %s61, 8
    %s63 = scalar_lea.vmem %s0, %s62
    %s64 = sadd.s32 0, 0
    %s65 = smul.u32 2, %s64
    %p66 = scmp.lt.s32.totalorder %s65, 1
    %s67 = scalar_select %p66, %s65, 1
    %s68 = smul.addr %s67, 2
    %s69 = smul.addr %s68, 8
    %s70 = scalar_lea.vmem %s2, %s69
    %s71 = sadd.s32 0, 0
    %s72 = smul.u32 2, %s71
    %p73 = scmp.lt.s32.totalorder %s72, 1
    %s74 = scalar_select %p73, %s72, 1
    %s75 = smul.addr %s74, 2
    %s76 = smul.addr %s75, 8
    %s77 = scalar_lea.vmem %s0, %s76
    %s78 = sadd.s32 0, 0
    %s79 = smul.u32 2, %s78
    %s80 = sadd.s32 0, 0
    %s81 = smul.u32 2, %s80
    %s82 = sadd.s32 0, 0
    %s83 = smul.u32 2, %s82
    %p84 = scmp.lt.s32.totalorder %s83, 1
    %s85 = scalar_select %p84, %s83, 1
    %s86 = smul.addr %s85, 2
    %s87 = smul.addr %s86, 8
    %s88 = scalar_lea.vmem %s2, %s87
    %s89 = sadd.s32 0, 0
    %s90 = smul.u32 2, %s89
    %p91 = scmp.eq.s32.totalorder 0, 0
    // Predicated region
    $region18: #{tpu_custom_call.1} parent=1 // pred_check
      %p92 = pneg %p91
    $region19: #{tpu_custom_call.1} parent=1 // pred_check_branch
      %94 = sbr.rel (%p92) target = $region21
    $region20: #{tpu_custom_call.1} parent=1 // pred_region
      %95 = vst [vmem:[#allocation2] sm:$0xff] 0.0
      %96 = vst [vmem:[#allocation2 + $0x8] sm:$0xff] 0.0
      %97 = vst [vmem:[#allocation3] sm:$0xff] 0.0
      %98 = vst [vmem:[#allocation3 + $0x8] sm:$0xff] 0.0
    $region21: #{tpu_custom_call.1} parent=1 // pred_fallthru
      _
    %v99 = vld [vmem:[%s77] sm:$0xff]
    %v100 = vld [vmem:[%s77 + $0x8] sm:$0xff]
    %v101 = vld [vmem:[#allocation4] sm:$0xff]
    %v102 = vld [vmem:[#allocation4 + $0x8] sm:$0xff]
    %v103 = vld [vmem:[%s88] sm:$0xff]
    %v104 = vld [vmem:[%s88 + $0x8] sm:$0xff]
    %vm105 = vcmp.ne.s32.totalorder %v103, 0
    %vm106 = vcmp.ne.s32.totalorder %v104, 0
    %v107 = vmax.f32 %v99, 0.0
    %v108 = vmax.f32 %v100, 0.0
    %v109 = vmul.f32 %v99, %v101
    %v110 = vmul.f32 %v100, %v102
    %v111 = vsub.f32 %v107, %v109
    %v112 = vsub.f32 %v108, %v110
    %v113 = vand.u32 2147483647, %v99
    %v114 = vand.u32 2147483647, %v100
    %v115 = vsub.f32 0.0, %v113
    %v116 = vsub.f32 0.0, %v114
    %v117 = vmul.f32 %v115, 1.442695
    %v118 = vpow.pop %v117
    %v119 = vmul.f32 %v116, 1.442695
    %v120 = vpow.pop %v119
    %v121 = vadd.f32 %v118, 1.0
    %v122 = vlog2.pop %v121
    %v123 = vmul.f32 %v122, 0.6931472
    %v124 = vmul.f32 -0.5, %v118
    %v125 = vadd.f32 %v124, 1.0
    %v126 = vmul.f32 %v125, %v118
    %v127 = vand.u32 2147483647, %v118
    %vm128 = vcmp.lt.f32.partialorder %v127, 0.0004427343
    %v129 = vsel %vm128, %v126, %v123
    %v130 = vadd.f32 %v120, 1.0
    %v131 = vlog2.pop %v130
    %v132 = vmul.f32 %v131, 0.6931472
    %v133 = vmul.f32 -0.5, %v120
    %v134 = vadd.f32 %v133, 1.0
    %v135 = vmul.f32 %v134, %v120
    %v136 = vand.u32 2147483647, %v120
    %vm137 = vcmp.lt.f32.partialorder %v136, 0.0004427343
    %v138 = vsel %vm137, %v135, %v132
    %v139 = vadd.f32 %v111, %v129
    %v140 = vadd.f32 %v112, %v138
    %v141 = vsel %vm105, %v139, 0.0
    %v142 = vsel %vm106, %v140, 0.0
    %v143 = vsel %vm105, 1, 0
    %v144 = vsel %vm106, 1, 0
    %v145 = vcvt.s32.f32 %v143
    %v146 = vcvt.s32.f32 %v144
    %v147 = vld [vmem:[%s77 + $0x10] sm:$0xff]
    %v148 = vld [vmem:[%s77 + $0x18] sm:$0xff]
    %v149 = vld [vmem:[#allocation4 + $0x10] sm:$0xff]
    %v150 = vld [vmem:[#allocation4 + $0x18] sm:$0xff]
    %v151 = vld [vmem:[%s88 + $0x10] sm:$0xff]
    %v152 = vld [vmem:[%s88 + $0x18] sm:$0xff]
    %vm153 = vcmp.ne.s32.totalorder %v151, 0
    %vm154 = vcmp.ne.s32.totalorder %v152, 0
    %v155 = vmax.f32 %v147, 0.0
    %v156 = vmax.f32 %v148, 0.0
    %v157 = vmul.f32 %v147, %v149
    %v158 = vmul.f32 %v148, %v150
    %v159 = vsub.f32 %v155, %v157
    %v160 = vsub.f32 %v156, %v158
    %v161 = vand.u32 2147483647, %v147
    %v162 = vand.u32 2147483647, %v148
    %v163 = vsub.f32 0.0, %v161
    %v164 = vsub.f32 0.0, %v162
    %v165 = vmul.f32 %v163, 1.442695
    %v166 = vpow.pop %v165
    %v167 = vmul.f32 %v164, 1.442695
    %v168 = vpow.pop %v167
    %v169 = vadd.f32 %v166, 1.0
    %v170 = vlog2.pop %v169
    %v171 = vmul.f32 %v170, 0.6931472
    %v172 = vmul.f32 -0.5, %v166
    %v173 = vadd.f32 %v172, 1.0
    %v174 = vmul.f32 %v173, %v166
    %v175 = vand.u32 2147483647, %v166
    %vm176 = vcmp.lt.f32.partialorder %v175, 0.0004427343
    %v177 = vsel %vm176, %v174, %v171
    %v178 = vadd.f32 %v168, 1.0
    %v179 = vlog2.pop %v178
    %v180 = vmul.f32 %v179, 0.6931472
    %v181 = vmul.f32 -0.5, %v168
    %v182 = vadd.f32 %v181, 1.0
    %v183 = vmul.f32 %v182, %v168
    %v184 = vand.u32 2147483647, %v168
    %vm185 = vcmp.lt.f32.partialorder %v184, 0.0004427343
    %v186 = vsel %vm185, %v183, %v180
    %v187 = vadd.f32 %v159, %v177
    %v188 = vadd.f32 %v160, %v186
    %v189 = vsel %vm153, %v187, 0.0
    %v190 = vsel %vm154, %v188, 0.0
    %v191 = vsel %vm153, 1, 0
    %v192 = vsel %vm154, 1, 0
    %v193 = vcvt.s32.f32 %v191
    %v194 = vcvt.s32.f32 %v192
    %v195 = vadd.f32 %v141, %v189
    %v196 = vadd.f32 %v142, %v190
    %v197 = vadd.f32 %v145, %v193
    %v198 = vadd.f32 %v146, %v194
    %v199 = vld [vmem:[#allocation2] sm:$0xff]
    %v200 = vld [vmem:[#allocation2 + $0x8] sm:$0xff]
    %v201 = vadd.f32 %v199, %v195
    %v202 = vadd.f32 %v200, %v196
    %203 = vst [vmem:[#allocation2] sm:$0xff] %v201
    %204 = vst [vmem:[#allocation2 + $0x8] sm:$0xff] %v202
    %v205 = vld [vmem:[#allocation3] sm:$0xff]
    %v206 = vld [vmem:[#allocation3 + $0x8] sm:$0xff]
    %v207 = vadd.f32 %v205, %v197
    %v208 = vadd.f32 %v206, %v198
    %209 = vst [vmem:[#allocation3] sm:$0xff] %v207
    %210 = vst [vmem:[#allocation3 + $0x8] sm:$0xff] %v208
    // Predicated region
    $region22: #{tpu_custom_call.1} parent=1 // pred_check
      %p211 = pneg %p91
    $region23: #{tpu_custom_call.1} parent=1 // pred_check_branch
      %213 = sbr.rel (%p211) target = $region25
    $region24: #{tpu_custom_call.1} parent=1 // pred_region
      %v214 = vld [vmem:[#allocation2] sm:$0xff]
      %v215 = vld [vmem:[#allocation2 + $0x8] sm:$0xff]
      %v216 = vadd.f32 %v214, %v215
      %217 = vadd.xlane.f32.xlu0 %v216
      %v218 = vpop.xlane.xlu0 %217
      %v219 = vrot.slane %v218, 4
      %v220 = vadd.f32 %v218, %v219
      %v221 = vrot.slane %v220, 2
      %v222 = vadd.f32 %v220, %v221
      %v223 = vrot.slane %v222, 1
      %v224 = vadd.f32 %v222, %v223
      %s225 = vtos %v224
      %v226 = vld [vmem:[#allocation3] sm:$0xff]
      %v227 = vld [vmem:[#allocation3 + $0x8] sm:$0xff]
      %v228 = vadd.f32 %v226, %v227
      %229 = vadd.xlane.f32.xlu0 %v228
      %v230 = vpop.xlane.xlu0 %229
      %v231 = vrot.slane %v230, 4
      %v232 = vadd.f32 %v230, %v231
      %v233 = vrot.slane %v232, 2
      %v234 = vadd.f32 %v232, %v233
      %v235 = vrot.slane %v234, 1
      %v236 = vadd.f32 %v234, %v235
      %s237 = vtos %v236
      %v238 = vlaneseq
      %v239 = vshrl.u32 %v238, 7
      %v240 = vlaneseq
      %v241 = vand.u32 %v240, 127
      %vm242 = vcmp.eq.s32.totalorder %v239, 0
      %vm243 = vcmp.eq.s32.totalorder %v241, 0
      %vm244 = vmand %vm242, %vm243
      %v245 = vstv %s225
      %v246 = vsel %vm244, %v245, 0.0
      %247 = vst [vmem:[#allocation7] sm:$0xff] %v246
      %v248 = vstv %s237
      %v249 = vsel %vm244, %v248, 0.0
      %250 = vst [vmem:[#allocation8] sm:$0xff] %v249
    $region25: #{tpu_custom_call.1} parent=1 // pred_fallthru
      _
    // Predicated region
    $region26: #{tpu_custom_call.1} parent=1 // pred_check
      _
    $region27: #{tpu_custom_call.1} parent=1 // pred_check_branch
      %252 = sbr.rel (0) target = $region29
    $region28: #{tpu_custom_call.1} parent=1 // pred_region
      %254 = vsyncadd [#allocation6], 0
      %s256 = sshll.u32 [#allocation7], 4
      %s257 = int_to_ptr.vmem [resolvable:$true] %s256
      %s258 = sshll.u32 %s3, 4
      %s259 = int_to_ptr.hbm [resolvable:$true] %s258
      %261 = dma.vmem_to_hbm [thread:$0]  %s257, 128, %s259, [#allocation6]
    $region29: #{tpu_custom_call.1} parent=1 // pred_fallthru
      _
    // Predicated region
    $region30: #{tpu_custom_call.1} parent=1 // pred_check
      _
    $region31: #{tpu_custom_call.1} parent=1 // pred_check_branch
      %263 = sbr.rel (0) target = $region33
    $region32: #{tpu_custom_call.1} parent=1 // pred_region
      %265 = vsyncadd [#allocation9], 0
      %s267 = sshll.u32 [#allocation8], 4
      %s268 = int_to_ptr.vmem [resolvable:$true] %s267
      %s269 = sshll.u32 %s4, 4
      %s270 = int_to_ptr.hbm [resolvable:$true] %s269
      %272 = dma.vmem_to_hbm [thread:$0]  %s268, 128, %s270, [#allocation9]
    $region33: #{tpu_custom_call.1} parent=1 // pred_fallthru
      _
    // Predicated region
    $region34: #{tpu_custom_call.1} parent=1 // pred_check
      _
    $region35: #{tpu_custom_call.1} parent=1 // pred_check_branch
      %274 = sbr.rel (0) target = $region37
    $region36: #{tpu_custom_call.1} parent=1 // pred_region
      %276 = dma.done [#allocation6], 128
    $region37: #{tpu_custom_call.1} parent=1 // pred_fallthru
      _
    // Predicated region
    $region38: #{tpu_custom_call.1} parent=1 // pred_check
      _
    $region39: #{tpu_custom_call.1} parent=1 // pred_check_branch
      %278 = sbr.rel (0) target = $region41
    $region40: #{tpu_custom_call.1} parent=1 // pred_region
      %280 = dma.done [#allocation9], 128
    $region41: #{tpu_custom_call.1} parent=1 // pred_fallthru
      _
    %281 = vsyncpa [#allocation5], 1
    %282 = vsyncpa [#allocation6], 1
    %283 = vsyncpa [#allocation9], 1

</llo_original>
